<compile_context>
chip_gen: v7x
topology: tpu7x:2x2x1
jax: 0.10.0
libtpu: 0.0.40
codegen_flags: <defaults>
</compile_context>

<pallas_src>
import functools
import math

import numpy as np

import jax
import jax.numpy as jnp
from jax.experimental import pallas as pl
from jax.experimental.pallas import tpu as pltpu

LANE = 128


def _round_up(x, m):
    return (x + m - 1) // m * m


# ---------------------------------------------------------------------------
# Kernel 1: per-row-block prep
#   XW  = X @ W_gcn                 (emitted bf16 for streaming)
#   RES = X @ Wr^T + (b_gcn+b_res)  (f32, biases folded once)
# ---------------------------------------------------------------------------
def _prep_kernel(x_ref, w_ref, wr_ref, bias_ref, xw_ref, res_ref):
    x = x_ref[...]
    xw = jnp.dot(x, w_ref[...], preferred_element_type=jnp.float32)
    xw_ref[...] = xw.astype(xw_ref.dtype)
    res = jnp.dot(x, wr_ref[...], preferred_element_type=jnp.float32) + bias_ref[...]
    res_ref[...] = res


# ---------------------------------------------------------------------------
# Kernel 2: block-sparse aggregation + epilogue
#   acc += A_hat[i, cb[i, j]] @ XW[cb[i, j]]        (only non-zero blocks)
#   epilogue: h = acc + res; LayerNorm over true C_out; ReLU
# ---------------------------------------------------------------------------
def _agg_kernel(col_ref, valid_ref, a_ref, xw_ref, res_ref, g_ref, b_ref,
                o_ref, acc_ref, *, c_out):
    i = pl.program_id(0)
    j = pl.program_id(1)

    @pl.when(j == 0)
    def _init():
        acc_ref[...] = jnp.zeros_like(acc_ref)

    # Skip padded / all-zero adjacency blocks (block-CSR validity mask in SMEM).
    @pl.when(valid_ref[i, j] == 1)
    def _accumulate():
        acc_ref[...] += jnp.dot(a_ref[...], xw_ref[...],
                                preferred_element_type=jnp.float32)

    @pl.when(j == pl.num_programs(1) - 1)
    def _epilogue():
        h = acc_ref[...] + res_ref[...]          # f32; both biases already folded in
        # LayerNorm over the true channel count only: channels are zero-padded to a
        # lane-dense multiple of 128, padded lanes of h are exactly 0 and carry
        # gamma = beta = 0, so they contribute nothing and output 0.
        lane = jax.lax.broadcasted_iota(jnp.int32, h.shape, 1)
        mask = lane < c_out
        inv_c = 1.0 / c_out
        mean = jnp.sum(jnp.where(mask, h, 0.0), axis=-1, keepdims=True) * inv_c
        diff = jnp.where(mask, h - mean, 0.0)
        var = jnp.sum(diff * diff, axis=-1, keepdims=True) * inv_c
        y = diff * jax.lax.rsqrt(var + 1e-5) * g_ref[...] + b_ref[...]
        o_ref[...] = jnp.maximum(y, 0.0).astype(o_ref.dtype)


# ---------------------------------------------------------------------------
# Glue (plain JAX / numpy): normalized adjacency + block-CSR table
# ---------------------------------------------------------------------------
def build_normalized_adjacency(edge_index, num_nodes):
    """Dense A_hat = D^-1/2 (A + I) D^-1/2 as in PyG GCNConv (add_self_loops)."""
    src = edge_index[0]
    dst = edge_index[1]
    loop = jnp.arange(num_nodes, dtype=edge_index.dtype)
    src = jnp.concatenate([src, loop])
    dst = jnp.concatenate([dst, loop])
    deg = jnp.zeros((num_nodes,), jnp.float32).at[dst].add(1.0)
    dinv = jnp.where(deg > 0, jax.lax.rsqrt(deg), 0.0)
    norm = dinv[src] * dinv[dst]
    a_hat = jnp.zeros((num_nodes, num_nodes), jnp.float32).at[dst, src].add(norm)
    return a_hat


def _build_block_csr(a_pad, tm, tk):
    """Per-row-block list of non-zero column blocks (padded, with validity mask)."""
    n_p = a_pad.shape[0]
    n_i, n_k = n_p // tm, n_p // tk
    blk_nz = np.asarray(
        jax.device_get(jnp.abs(a_pad).reshape(n_i, tm, n_k, tk).sum((1, 3)) > 0))
    max_nnz = max(1, int(blk_nz.sum(axis=1).max()))
    col_tbl = np.zeros((n_i, max_nnz), np.int32)
    val_tbl = np.zeros((n_i, max_nnz), np.int32)
    for i in range(n_i):
        cols = np.nonzero(blk_nz[i])[0].astype(np.int32)
        nnz = int(cols.size)
        if nnz == 0:                       # fully padded row block: dummy, masked
            cols = np.array([min(i, n_k - 1)], dtype=np.int32)
        fill = np.full((max_nnz,), cols[-1], np.int32)   # repeat last -> DMA elided
        fill[: cols.size] = cols
        col_tbl[i] = fill
        val_tbl[i, :nnz] = 1
    return col_tbl, val_tbl, int(blk_nz.sum()), max_nnz


# ---------------------------------------------------------------------------
# Wrapper
# ---------------------------------------------------------------------------
def sparse_gcn_block(x, edge_index, params, *, tm=128, tk=128):
    """x: [N, C_in] f32, edge_index: [2, E] int32 -> [N, C_out] f32."""
    n, c_in = x.shape
    c_out = params["w_gcn"].shape[1]

    c_in_p = _round_up(c_in, LANE)
    c_out_p = _round_up(c_out, LANE)
    n_p = _round_up(n, math.lcm(tm, tk))
    n_i = n_p // tm

    # ---- adjacency (glue) + block-CSR table (scalar-prefetch inputs) ----
    a_hat = build_normalized_adjacency(edge_index, n)
    a_pad = jnp.zeros((n_p, n_p), jnp.float32).at[:n, :n].set(a_hat)
    a_bf = a_pad.astype(jnp.bfloat16)                      # halve HBM traffic
    col_tbl, val_tbl, nnz_blocks, max_nnz = _build_block_csr(a_pad, tm, tk)

    # ---- zero-pad parameters / input to lane-dense shapes ----
    w_gcn = jnp.zeros((c_in_p, c_out_p), jnp.float32).at[:c_in, :c_out].set(
        params["w_gcn"])
    if params.get("w_res") is not None:
        wr = params["w_res"].T
        b_res = params["b_res"]
    else:                                  # Identity residual (c_in == c_out)
        wr = jnp.eye(c_in, c_out, dtype=jnp.float32)
        b_res = jnp.zeros((c_out,), jnp.float32)
    wr_t = jnp.zeros((c_in_p, c_out_p), jnp.float32).at[:c_in, :c_out].set(wr)
    bias = jnp.zeros((1, c_out_p), jnp.float32).at[0, :c_out].set(
        params["b_gcn"] + b_res)
    gamma = jnp.zeros((1, c_out_p), jnp.float32).at[0, :c_out].set(params["ln_gamma"])
    beta = jnp.zeros((1, c_out_p), jnp.float32).at[0, :c_out].set(params["ln_beta"])
    x_pad = jnp.zeros((n_p, c_in_p), jnp.float32).at[:n, :c_in].set(x)

    # ---- call 1: XW (bf16) + residual-with-folded-bias (f32), tiled over rows ----
    xw_bf, res_f32 = pl.pallas_call(
        _prep_kernel,
        out_shape=(jax.ShapeDtypeStruct((n_p, c_out_p), jnp.bfloat16),
                   jax.ShapeDtypeStruct((n_p, c_out_p), jnp.float32)),
        grid_spec=pltpu.PrefetchScalarGridSpec(
            num_scalar_prefetch=0,
            grid=(n_i,),
            in_specs=[
                pl.BlockSpec((tm, c_in_p), lambda i: (i, 0)),
                pl.BlockSpec((c_in_p, c_out_p), lambda i: (0, 0)),
                pl.BlockSpec((c_in_p, c_out_p), lambda i: (0, 0)),
                pl.BlockSpec((1, c_out_p), lambda i: (0, 0)),
            ],
            out_specs=[
                pl.BlockSpec((tm, c_out_p), lambda i: (i, 0)),
                pl.BlockSpec((tm, c_out_p), lambda i: (i, 0)),
            ],
        ),
        compiler_params=pltpu.CompilerParams(
            dimension_semantics=("parallel",),
            vmem_limit_bytes=32 * 1024 * 1024),
    )(x_pad, w_gcn, wr_t, bias)

    # ---- call 2: block-sparse A_hat @ XW + epilogue ----
    cost = pl.CostEstimate(
        flops=2 * nnz_blocks * tm * tk * c_out_p + 10 * n_p * c_out_p,
        transcendentals=n_p,
        bytes_accessed=(nnz_blocks * tm * tk * 2           # A_hat tiles (bf16)
                        + n_i * max_nnz * tk * c_out_p * 2  # XW streams (bf16)
                        + 2 * n_p * c_out_p * 4))           # res in + out (f32)

    out_pad = pl.pallas_call(
        functools.partial(_agg_kernel, c_out=c_out),
        out_shape=jax.ShapeDtypeStruct((n_p, c_out_p), jnp.float32),
        grid_spec=pltpu.PrefetchScalarGridSpec(
            num_scalar_prefetch=2,                 # col table + validity mask
            grid=(n_i, max_nnz),
            in_specs=[
                pl.BlockSpec((tm, tk), lambda i, j, cb, vb: (i, cb[i, j])),
                pl.BlockSpec((tk, c_out_p), lambda i, j, cb, vb: (cb[i, j], 0)),
                pl.BlockSpec((tm, c_out_p), lambda i, j, cb, vb: (i, 0)),
                pl.BlockSpec((1, c_out_p), lambda i, j, cb, vb: (0, 0)),
                pl.BlockSpec((1, c_out_p), lambda i, j, cb, vb: (0, 0)),
            ],
            out_specs=pl.BlockSpec((tm, c_out_p), lambda i, j, cb, vb: (i, 0)),
            scratch_shapes=[pltpu.VMEM((tm, c_out_p), jnp.float32)],
        ),
        compiler_params=pltpu.CompilerParams(
            dimension_semantics=("parallel", "arbitrary"),
            vmem_limit_bytes=32 * 1024 * 1024),
        cost_estimate=cost,
    )(jnp.asarray(col_tbl), jnp.asarray(val_tbl),
      a_bf, xw_bf, res_f32, gamma, beta)

    return out_pad[:n, :c_out]


# ---------------------------------------------------------------------------
# Parameter init + pure-JAX reference
# ---------------------------------------------------------------------------
def init_params(key, in_channels, out_channels):
    k1, k2, k3, _ = jax.random.split(key, 4)
    glorot = math.sqrt(6.0 / (in_channels + out_channels))
    w_gcn = jax.random.uniform(k1, (in_channels, out_channels), jnp.float32,
                               -glorot, glorot)
    b_gcn = jnp.zeros((out_channels,), jnp.float32)
    bound = 1.0 / math.sqrt(in_channels)
    w_res = jax.random.uniform(k2, (out_channels, in_channels), jnp.float32,
                               -bound, bound)
    b_res = jax.random.uniform(k3, (out_channels,), jnp.float32, -bound, bound)
    return dict(w_gcn=w_gcn, b_gcn=b_gcn, w_res=w_res, b_res=b_res,
                ln_gamma=jnp.ones((out_channels,), jnp.float32),
                ln_beta=jnp.zeros((out_channels,), jnp.float32))


def reference(x, edge_index, params):
    a_hat = build_normalized_adjacency(edge_index, x.shape[0])
    agg = a_hat @ (x @ params["w_gcn"]) + params["b_gcn"]
    res = x @ params["w_res"].T + params["b_res"]
    h = agg + res
    mean = h.mean(-1, keepdims=True)
    var = ((h - mean) ** 2).mean(-1, keepdims=True)
    hn = (h - mean) * jax.lax.rsqrt(var + 1e-5)
    y = hn * params["ln_gamma"] + params["ln_beta"]
    return jnp.maximum(y, 0.0)


if __name__ == "__main__":
    key = jax.random.PRNGKey(0)
    kx, kp = jax.random.split(key)

    N, C_IN, C_OUT = 256, 8, 16

    x = jax.random.normal(kx, (N, C_IN), jnp.float32)

    # Deterministic graph: two disconnected 128-node rings (each node <-> next /
    # previous).  With (128, 128) tiles the adjacency is block-diagonal, so the
    # block-sparse aggregation kernel skips the off-diagonal tiles entirely.
    half = N // 2
    idx0 = jnp.arange(half, dtype=jnp.int32)

    def ring_edges(offset):
        s = jnp.concatenate([idx0, idx0]) + offset
        d = jnp.concatenate([(idx0 + 1) % half, (idx0 - 1) % half]) + offset
        return s, d

    s0, d0 = ring_edges(0)
    s1, d1 = ring_edges(half)
    edge_index = jnp.stack([jnp.concatenate([s0, s1]),
                            jnp.concatenate([d0, d1])], axis=0).astype(jnp.int32)

    params = init_params(kp, C_IN, C_OUT)

    out = sparse_gcn_block(x, edge_index, params)
    out = jax.block_until_ready(out)

    ref = reference(x, edge_index, params)
    assert out.shape == (N, C_OUT)
    # A_hat / XW are streamed as bf16 (f32 accumulation & epilogue), so compare
    # against the f32 reference at a bf16-operand-appropriate tolerance.
    max_err = float(jnp.max(jnp.abs(out - ref)))
    assert jnp.allclose(out, ref, atol=5e-2, rtol=5e-2), \
        f"mismatch vs reference (max |err| = {max_err})"

    print("KERNEL_OK")
</pallas_src>

<mosaic_0001>
module attributes {stable_mosaic.version = 11 : i64} {
  func.func @_prep_kernel(%arg0: i32, %arg1: memref<128x128xf32, #tpu.memory_space<vmem>>, %arg2: memref<128x128xf32, #tpu.memory_space<vmem>>, %arg3: memref<128x128xf32, #tpu.memory_space<vmem>>, %arg4: memref<1x128xf32, #tpu.memory_space<vmem>>, %arg5: memref<128x128xbf16, #tpu.memory_space<vmem>>, %arg6: memref<128x128xf32, #tpu.memory_space<vmem>>) attributes {dimension_semantics = [#tpu.dimension_semantics<parallel>], iteration_bounds = array<i64: 2>, scalar_prefetch = 0 : i64, scratch_operands = 0 : i64, tpu.core_type = #tpu.core_type<tc>, window_params = [{transform_indices = @transform_0, window_bounds = array<i64: 128, 128>}, {pipeline_mode = #tpu.pipeline_mode<synchronous>, transform_indices = @transform_1, window_bounds = array<i64: 128, 128>}, {pipeline_mode = #tpu.pipeline_mode<synchronous>, transform_indices = @transform_2, window_bounds = array<i64: 128, 128>}, {pipeline_mode = #tpu.pipeline_mode<synchronous>, transform_indices = @transform_3, window_bounds = array<i64: 1, 128>}, {transform_indices = @transform_4, window_bounds = array<i64: 128, 128>}, {transform_indices = @transform_5, window_bounds = array<i64: 128, 128>}]} {
    %c0 = arith.constant 0 : index
    %c0_0 = arith.constant 0 : index
    %0 = vector.load %arg1[%c0, %c0_0] : memref<128x128xf32, #tpu.memory_space<vmem>>, vector<128x128xf32>
    %c0_1 = arith.constant 0 : index
    %c0_2 = arith.constant 0 : index
    %1 = vector.load %arg2[%c0_1, %c0_2] : memref<128x128xf32, #tpu.memory_space<vmem>>, vector<128x128xf32>
    %cst = arith.constant dense<0.000000e+00> : vector<128x128xf32>
    %2 = tpu.matmul %0, %1, %cst {dimension_numbers = #tpu.dot_dimension_numbers<[1], [0], [0], [1], [0, 0, 1, 1], [], []>} : vector<128x128xf32>, vector<128x128xf32>, vector<128x128xf32> -> vector<128x128xf32>
    %3 = arith.truncf %2 : vector<128x128xf32> to vector<128x128xbf16>
    %c0_3 = arith.constant 0 : index
    %c0_4 = arith.constant 0 : index
    %4 = vector.load %arg5[%c0_3, %c0_4] : memref<128x128xbf16, #tpu.memory_space<vmem>>, vector<128x128xbf16>
    tpu.vector_store %arg5[%c0_3, %c0_4], %3 {strides = array<i32>} : memref<128x128xbf16, #tpu.memory_space<vmem>>, vector<128x128xbf16>,
    %c0_5 = arith.constant 0 : index
    %c0_6 = arith.constant 0 : index
    %5 = vector.load %arg3[%c0_5, %c0_6] : memref<128x128xf32, #tpu.memory_space<vmem>>, vector<128x128xf32>
    %cst_7 = arith.constant dense<0.000000e+00> : vector<128x128xf32>
    %6 = tpu.matmul %0, %5, %cst_7 {dimension_numbers = #tpu.dot_dimension_numbers<[1], [0], [0], [1], [0, 0, 1, 1], [], []>} : vector<128x128xf32>, vector<128x128xf32>, vector<128x128xf32> -> vector<128x128xf32>
    %c0_8 = arith.constant 0 : index
    %c0_9 = arith.constant 0 : index
    %7 = vector.load %arg4[%c0_8, %c0_9] : memref<1x128xf32, #tpu.memory_space<vmem>>, vector<1x128xf32>
    %8 = vector.broadcast %7 : vector<1x128xf32> to vector<128x128xf32>
    %9 = arith.addf %6, %8 : vector<128x128xf32>
    %c0_10 = arith.constant 0 : index
    %c0_11 = arith.constant 0 : index
    %10 = vector.load %arg6[%c0_10, %c0_11] : memref<128x128xf32, #tpu.memory_space<vmem>>, vector<128x128xf32>
    tpu.vector_store %arg6[%c0_10, %c0_11], %9 {strides = array<i32>} : memref<128x128xf32, #tpu.memory_space<vmem>>, vector<128x128xf32>,
    return
  }
  func.func @transform_0(%arg0: i32) -> (i32, i32) {
    %c0_i32 = arith.constant 0 : i32
    %c0_i32_0 = arith.constant 0 : i32
    return %arg0, %c0_i32 : i32, i32
  }
  func.func @transform_1(%arg0: i32) -> (i32, i32) {
    %c0_i32 = arith.constant 0 : i32
    %c0_i32_0 = arith.constant 0 : i32
    %c0_i32_1 = arith.constant 0 : i32
    return %c0_i32, %c0_i32_0 : i32, i32
  }
  func.func @transform_2(%arg0: i32) -> (i32, i32) {
    %c0_i32 = arith.constant 0 : i32
    %c0_i32_0 = arith.constant 0 : i32
    %c0_i32_1 = arith.constant 0 : i32
    return %c0_i32, %c0_i32_0 : i32, i32
  }
  func.func @transform_3(%arg0: i32) -> (i32, i32) {
    %c0_i32 = arith.constant 0 : i32
    %c0_i32_0 = arith.constant 0 : i32
    %c0_i32_1 = arith.constant 0 : i32
    return %c0_i32, %c0_i32_0 : i32, i32
  }
  func.func @transform_4(%arg0: i32) -> (i32, i32) {
    %c0_i32 = arith.constant 0 : i32
    %c0_i32_0 = arith.constant 0 : i32
    return %arg0, %c0_i32 : i32, i32
  }
  func.func @transform_5(%arg0: i32) -> (i32, i32) {
    %c0_i32 = arith.constant 0 : i32
    %c0_i32_0 = arith.constant 0 : i32
    return %arg0, %c0_i32 : i32, i32
  }
}

</mosaic_0001>

<llo_original>
// kernel: tpu_custom_call.1
$region0: #{tpu_custom_call.1}
  #allocation0 [shape = 'u32[]', space=smem, size = 0x4, offset = 0x4, fixed_abs, tag = 'smem constant byte address 0x4 - core index']
  #allocation1 [shape = 'u32[144,128]{1,0:T(1,128)}', space=vmem, size = 0x12000, scoped, tag = 'internal scratch']
  %s0 = inlined_call_operand.hbm [shape: f32[256,128], index: 0, kind: input, shape index: {}]
  %s1 = inlined_call_operand.hbm [shape: f32[128,128], index: 1, kind: input, shape index: {}]
  %s2 = inlined_call_operand.hbm [shape: f32[128,128], index: 2, kind: input, shape index: {}]
  %s3 = inlined_call_operand.vmem [shape: f32[1,128], index: 3, kind: input, shape index: {}]
  %s4 = inlined_call_operand.hbm [shape: bf16[256,128], index: 4, kind: output, shape index: {0}]
  %s5 = inlined_call_operand.hbm [shape: f32[256,128], index: 5, kind: output, shape index: {1}]
  %6 = xla_tuple %s4, %s5
  %s7 = sld [smem:[#allocation0]]
  $region69: #{tpu_custom_call.1} parent=0
    _
  %s9 = ssub.s32 1, %s7
  %s10 = scalar_select 0, %s9, %s7
  $region1: #{tpu_custom_call.1} parent=0
    #allocation2 [shape = 'u8[131072]{0}', space=vmem, size = 0x20000, scoped, tag = 'input window, operand 0']
    #allocation3 [shape = 's32[2]{0}', space=sflag, size = 0x8, scoped, tag = 'scoped memory for tpu_custom_call.1']
    #allocation4 [shape = 's32[2]{0}', space=sflag, size = 0x8, scoped, tag = 'scoped memory for tpu_custom_call.1']
    #allocation5 [shape = 'u8[65536]{0}', space=vmem, size = 0x10000, scoped, tag = 'input window, operand 1, single buffered']
    #allocation6 [shape = 's32[1]{0}', space=sflag, size = 0x4, scoped, tag = 'scoped memory for tpu_custom_call.1']
    #allocation7 [shape = 'u8[65536]{0}', space=vmem, size = 0x10000, scoped, tag = 'input window, operand 2, single buffered']
    #allocation8 [shape = 'u8[65536]{0}', space=vmem, size = 0x10000, scoped, tag = 'output window, operand 0']
    #allocation9 [shape = 'u8[131072]{0}', space=vmem, size = 0x20000, scoped, tag = 'output window, operand 1']
    #allocation10 [shape = 's32[2]{0}', space=sflag, size = 0x8, scoped, tag = 'scoped memory for tpu_custom_call.1']
    %11 = vsyncpa [#allocation3], 0
    %s12 = scalar_lea.sflag [#allocation3], 1
    %13 = vsyncpa %s12, 0
    %14 = vsyncpa [#allocation6], 0
    %15 = vsyncpa [#allocation4], 0
    %s16 = scalar_lea.sflag [#allocation4], 1
    %17 = vsyncpa %s16, 0
    %18 = vsyncpa [#allocation10], 0
    %s19 = scalar_lea.sflag [#allocation10], 1
    %20 = vsyncpa %s19, 0
    loop: start=0, step=1, limit=4
    $region2: #{tpu_custom_call.1} parent=1 // loop_pre_header
      _
    $region3: #{tpu_custom_call.1} parent=1 // loop_header
      %s22 = sphi 0, %s26
      %p23 = scmp.ge.s32.totalorder %s22, 4
      %s32 = sphi 0, %s34
      %s35 = sphi 0, %s32
      %s36 = sphi 0, %s35
      %s52 = sphi 0, %s36
      %s56 = sphi 0, %s56
      %s58 = sphi 0, %s56
      %s59 = sphi 0, %s58
      %s73 = sphi 0, %s59
      %s77 = sphi 0, %s77
      %s79 = sphi 0, %s77
      %s80 = sphi 0, %s79
      %s94 = sphi 0, %s80
      %s98 = sphi 0, %s98
      %s100 = sphi 0, %s98
      %s101 = sphi 0, %s100
      %s115 = sphi 0, %s101
      %s121 = sphi 0, %s123
      %s124 = sphi 0, %s121
      %s125 = sphi 0, %s124
      %s141 = sphi 0, %s125
      %s147 = sphi 0, %s149
      %s150 = sphi 0, %s147
      %s151 = sphi 0, %s150
      %s167 = sphi 0, %s151
    $region4: #{tpu_custom_call.1} parent=1 // loop_header_branch
      %25 = sbr.rel (%p23) target = $region8
    $region5: #{tpu_custom_call.1} parent=1 // loop_body
      %s27 = ssub.s32 %s22, 1
      %s28 = ssub.s32 %s22, 2
      %s29 = sadd.s32 %s22, 1
      %s30 = ssub.s32 %s22, %s29
      %p31 = scmp.eq.s32.totalorder %s30, 0
      %s33 = sadd.s32 %s32, 1
      %s34 = scalar_select %p31, %s32, %s33
      %p37 = pneg %p31
      %p38 = scmp.eq.s32.totalorder %s22, 1
      %p39 = por %p37, %p38
      %p40 = scmp.ne.s32.totalorder %s32, %s35
      %p41 = scmp.eq.s32.totalorder %s22, 0
      %p42 = por %p40, %p41
      %p43 = scmp.ne.s32.totalorder %s32, %s35
      %p44 = scmp.eq.s32.totalorder %s27, 1
      %p45 = por %p43, %p44
      %p46 = scmp.ne.s32.totalorder %s35, %s36
      %p47 = scmp.eq.s32.totalorder %s27, 0
      %p48 = por %p46, %p47
      %p49 = scmp.ne.s32.totalorder %s35, %s36
      %p50 = scmp.eq.s32.totalorder %s28, 1
      %p51 = por %p49, %p50
      %p53 = scmp.ne.s32.totalorder %s36, %s52
      %p54 = scmp.eq.s32.totalorder %s28, 0
      %p55 = por %p53, %p54
      %s57 = sadd.s32 %s56, 1
      %p60 = scmp.eq.s32.totalorder %s22, 1
      %p61 = scmp.ne.s32.totalorder %s56, %s58
      %p62 = scmp.eq.s32.totalorder %s22, 0
      %p63 = por %p61, %p62
      %p64 = scmp.ne.s32.totalorder %s56, %s58
      %p65 = scmp.eq.s32.totalorder %s27, 1
      %p66 = por %p64, %p65
      %p67 = scmp.ne.s32.totalorder %s58, %s59
      %p68 = scmp.eq.s32.totalorder %s27, 0
      %p69 = por %p67, %p68
      %p70 = scmp.ne.s32.totalorder %s58, %s59
      %p71 = scmp.eq.s32.totalorder %s28, 1
      %p72 = por %p70, %p71
      %p74 = scmp.ne.s32.totalorder %s59, %s73
      %p75 = scmp.eq.s32.totalorder %s28, 0
      %p76 = por %p74, %p75
      %s78 = sadd.s32 %s77, 1
      %p81 = scmp.eq.s32.totalorder %s22, 1
      %p82 = scmp.ne.s32.totalorder %s77, %s79
      %p83 = scmp.eq.s32.totalorder %s22, 0
      %p84 = por %p82, %p83
      %p85 = scmp.ne.s32.totalorder %s77, %s79
      %p86 = scmp.eq.s32.totalorder %s27, 1
      %p87 = por %p85, %p86
      %p88 = scmp.ne.s32.totalorder %s79, %s80
      %p89 = scmp.eq.s32.totalorder %s27, 0
      %p90 = por %p88, %p89
      %p91 = scmp.ne.s32.totalorder %s79, %s80
      %p92 = scmp.eq.s32.totalorder %s28, 1
      %p93 = por %p91, %p92
      %p95 = scmp.ne.s32.totalorder %s80, %s94
      %p96 = scmp.eq.s32.totalorder %s28, 0
      %p97 = por %p95, %p96
      %s99 = sadd.s32 %s98, 1
      %p102 = scmp.eq.s32.totalorder %s22, 1
      %p103 = scmp.ne.s32.totalorder %s98, %s100
      %p104 = scmp.eq.s32.totalorder %s22, 0
      %p105 = por %p103, %p104
      %p106 = scmp.ne.s32.totalorder %s98, %s100
      %p107 = scmp.eq.s32.totalorder %s27, 1
      %p108 = por %p106, %p107
      %p109 = scmp.ne.s32.totalorder %s100, %s101
      %p110 = scmp.eq.s32.totalorder %s27, 0
      %p111 = por %p109, %p110
      %p112 = scmp.ne.s32.totalorder %s100, %s101
      %p113 = scmp.eq.s32.totalorder %s28, 1
      %p114 = por %p112, %p113
      %p116 = scmp.ne.s32.totalorder %s101, %s115
      %p117 = scmp.eq.s32.totalorder %s28, 0
      %p118 = por %p116, %p117
      %s119 = ssub.s32 %s22, %s29
      %p120 = scmp.eq.s32.totalorder %s119, 0
      %s122 = sadd.s32 %s121, 1
      %s123 = scalar_select %p120, %s121, %s122
      %p126 = pneg %p120
      %p127 = scmp.eq.s32.totalorder %s22, 1
      %p128 = por %p126, %p127
      %p129 = scmp.ne.s32.totalorder %s121, %s124
      %p130 = scmp.eq.s32.totalorder %s22, 0
      %p131 = por %p129, %p130
      %p132 = scmp.ne.s32.totalorder %s121, %s124
      %p133 = scmp.eq.s32.totalorder %s27, 1
      %p134 = por %p132, %p133
      %p135 = scmp.ne.s32.totalorder %s124, %s125
      %p136 = scmp.eq.s32.totalorder %s27, 0
      %p137 = por %p135, %p136
      %p138 = scmp.ne.s32.totalorder %s124, %s125
      %p139 = scmp.eq.s32.totalorder %s28, 1
      %p140 = por %p138, %p139
      %p142 = scmp.ne.s32.totalorder %s125, %s141
      %p143 = scmp.eq.s32.totalorder %s28, 0
      %p144 = por %p142, %p143
      %s145 = ssub.s32 %s22, %s29
      %p146 = scmp.eq.s32.totalorder %s145, 0
      %s148 = sadd.s32 %s147, 1
      %s149 = scalar_select %p146, %s147, %s148
      %p152 = pneg %p146
      %p153 = scmp.eq.s32.totalorder %s22, 1
      %p154 = por %p152, %p153
      %p155 = scmp.ne.s32.totalorder %s147, %s150
      %p156 = scmp.eq.s32.totalorder %s22, 0
      %p157 = por %p155, %p156
      %p158 = scmp.ne.s32.totalorder %s147, %s150
      %p159 = scmp.eq.s32.totalorder %s27, 1
      %p160 = por %p158, %p159
      %p161 = scmp.ne.s32.totalorder %s150, %s151
      %p162 = scmp.eq.s32.totalorder %s27, 0
      %p163 = por %p161, %p162
      %p164 = scmp.ne.s32.totalorder %s150, %s151
      %p165 = scmp.eq.s32.totalorder %s28, 1
      %p166 = por %p164, %p165
      %p168 = scmp.ne.s32.totalorder %s151, %s167
      %p169 = scmp.eq.s32.totalorder %s28, 0
      %p170 = por %p168, %p169
      %p171 = scmp.le.s32.totalorder 1, %s22
      %p172 = scmp.lt.s32.totalorder %s22, 3
      %p173 = pnand %p171, %p172
      %p174 = pneg %p173
      // Predicated region
      $region9: #{tpu_custom_call.1} parent=5 // pred_check
        _
      $region10: #{tpu_custom_call.1} parent=5 // pred_check_branch
        %176 = sbr.rel (%p173) target = $region12
      $region11: #{tpu_custom_call.1} parent=5 // pred_region
        %s177 = ssub.s32 %s22, 1
        // Predicated region
        $region13: #{tpu_custom_call.1} parent=11 // pred_check
          %p178 = pneg %p69
        $region14: #{tpu_custom_call.1} parent=11 // pred_check_branch
          %180 = sbr.rel (%p178) target = $region16
        $region15: #{tpu_custom_call.1} parent=11 // pred_region
          %s182 = ssub.s32 2048, 2048
          %183 = vsyncadd [#allocation6], %s182
          %s184 = sshll.u32 [#allocation5], 4
          %s185 = int_to_ptr.vmem [resolvable:$true] %s184
          %190 = dma.hbm_to_vmem [thread:$0]  %s1, 2048, %s185, [#allocation6], 128, 128, 8
        $region16: #{tpu_custom_call.1} parent=11 // pred_fallthru
          _
        // Predicated region
        $region17: #{tpu_custom_call.1} parent=11 // pred_check
          %p191 = pneg %p90
        $region18: #{tpu_custom_call.1} parent=11 // pred_check_branch
          %193 = sbr.rel (%p191) target = $region20
        $region19: #{tpu_custom_call.1} parent=11 // pred_region
          %s195 = ssub.s32 2048, 2048
          %196 = vsyncadd [#allocation6], %s195
          %s197 = sshll.u32 [#allocation7], 4
          %s198 = int_to_ptr.vmem [resolvable:$true] %s197
          %203 = dma.hbm_to_vmem [thread:$0]  %s2, 2048, %s198, [#allocation6], 128, 128, 8
        $region20: #{tpu_custom_call.1} parent=11 // pred_fallthru
          _
        // Predicated region
        $region21: #{tpu_custom_call.1} parent=11 // pred_check
          %p204 = pneg %p111
        $region22: #{tpu_custom_call.1} parent=11 // pred_check_branch
          %206 = sbr.rel (%p204) target = $region24
        $region23: #{tpu_custom_call.1} parent=11 // pred_region
          _
        $region24: #{tpu_custom_call.1} parent=11 // pred_fallthru
          _
      $region12: #{tpu_custom_call.1} parent=5 // pred_fallthru
        _
      %p207 = scmp.lt.s32.totalorder %s22, 2
      // Predicated region
      $region25: #{tpu_custom_call.1} parent=5 // pred_check
        %p208 = pneg %p207
      $region26: #{tpu_custom_call.1} parent=5 // pred_check_branch
        %210 = sbr.rel (%p208) target = $region28
      $region27: #{tpu_custom_call.1} parent=5 // pred_region
        // Predicated region
        $region29: #{tpu_custom_call.1} parent=27 // pred_check
          %p211 = pneg %p42
        $region30: #{tpu_custom_call.1} parent=27 // pred_check_branch
          %213 = sbr.rel (%p211) target = $region32
        $region31: #{tpu_custom_call.1} parent=27 // pred_region
          %s214 = sand.u32 %s32, 1
          %s215 = scalar_lea.sflag [#allocation3], %s214
          %s216 = sand.u32 %s32, 1
          %s217 = smul.addr %s216, 128
          %s218 = scalar_lea.vmem [#allocation2], %s217
          %s219 = smul.u32 16, %s22
          %s221 = ssub.s32 2048, 2048
          %222 = vsyncadd %s215, %s221
          %s223 = smul.addr %s219, 128
          %s224 = scalar_lea.hbm %s0, %s223
          %s225 = sshll.u32 %s218, 4
          %s226 = int_to_ptr.vmem [resolvable:$true] %s225
          %231 = dma.hbm_to_vmem [thread:$0]  %s224, 2048, %s226, %s215, 128, 128, 8
        $region32: #{tpu_custom_call.1} parent=27 // pred_fallthru
          _
      $region28: #{tpu_custom_call.1} parent=5 // pred_fallthru
        _
      %p232 = scmp.le.s32.totalorder 1, %s22
      %p233 = scmp.lt.s32.totalorder %s22, 3
      %p234 = pnand %p232, %p233
      %p235 = pneg %p234
      // Predicated region
      $region33: #{tpu_custom_call.1} parent=5 // pred_check
        _
      $region34: #{tpu_custom_call.1} parent=5 // pred_check_branch
        %237 = sbr.rel (%p234) target = $region36
      $region35: #{tpu_custom_call.1} parent=5 // pred_region
        %s238 = ssub.s32 %s22, 1
        %s239 = sand.u32 %s35, 1
        %s240 = scalar_lea.sflag [#allocation3], %s239
        %s241 = sand.u32 %s35, 1
        %s242 = smul.addr %s241, 128
        %s243 = scalar_lea.vmem [#allocation2], %s242
        // Predicated region
        $region37: #{tpu_custom_call.1} parent=35 // pred_check
          %p244 = pneg %p48
        $region38: #{tpu_custom_call.1} parent=35 // pred_check_branch
          %246 = sbr.rel (%p244) target = $region40
        $region39: #{tpu_custom_call.1} parent=35 // pred_region
          %247 = dma.done %s240, 2048
        $region40: #{tpu_custom_call.1} parent=35 // pred_fallthru
          _
        // Predicated region
        $region41: #{tpu_custom_call.1} parent=35 // pred_check
          %p248 = pneg %p69
        $region42: #{tpu_custom_call.1} parent=35 // pred_check_branch
          %250 = sbr.rel (%p248) target = $region44
        $region43: #{tpu_custom_call.1} parent=35 // pred_region
          %251 = dma.done [#allocation6], 2048
        $region44: #{tpu_custom_call.1} parent=35 // pred_fallthru
          _
        // Predicated region
        $region45: #{tpu_custom_call.1} parent=35 // pred_check
          %p252 = pneg %p90
        $region46: #{tpu_custom_call.1} parent=35 // pred_check_branch
          %254 = sbr.rel (%p252) target = $region48
        $region47: #{tpu_custom_call.1} parent=35 // pred_region
          %255 = dma.done [#allocation6], 2048
        $region48: #{tpu_custom_call.1} parent=35 // pred_fallthru
          _
        %s256 = sand.u32 %s35, 1
        %s257 = scalar_lea.sflag [#allocation3], %s256
        %s258 = sand.u32 %s35, 1
        %s259 = smul.addr %s258, 128
        %s260 = scalar_lea.vmem [#allocation2], %s259
        %p261 = pneg %p48
        %p262 = pneg %p45
        %p263 = pneg %p69
        %p264 = pneg %p66
        %p265 = pneg %p90
        %p266 = pneg %p87
        %p267 = pneg %p111
        %p268 = pneg %p108
        %p269 = pneg %p137
        %p270 = pneg %p134
        %s271 = sand.u32 %s124, 1
        %s272 = scalar_lea.sflag [#allocation4], %s271
        %s273 = sand.u32 %s124, 1
        %s274 = smul.addr %s273, 64
        %s275 = scalar_lea.vmem [#allocation8], %s274
        %p276 = pneg %p163
        %p277 = pneg %p160
        %s278 = sand.u32 %s150, 1
        %s279 = scalar_lea.sflag [#allocation10], %s278
        %s280 = sand.u32 %s150, 1
        %s281 = smul.addr %s280, 128
        %s282 = scalar_lea.vmem [#allocation9], %s281
        %s283 = smul.u32 16, %s27
        %s284 = smul.u32 16, %s27
        %s285 = smul.u32 16, %s27
        %v286 = vld [vmem:[%s243] sm:$0xff]
        %v287 = vld [vmem:[%s243 + $0x8] sm:$0xff]
        %v288 = vld [vmem:[%s243 + $0x10] sm:$0xff]
        %v289 = vld [vmem:[%s243 + $0x18] sm:$0xff]
        %v290 = vld [vmem:[%s243 + $0x20] sm:$0xff]
        %v291 = vld [vmem:[%s243 + $0x28] sm:$0xff]
        %v292 = vld [vmem:[%s243 + $0x30] sm:$0xff]
        %v293 = vld [vmem:[%s243 + $0x38] sm:$0xff]
        %v294 = vld [vmem:[%s243 + $0x40] sm:$0xff]
        %v295 = vld [vmem:[%s243 + $0x48] sm:$0xff]
        %v296 = vld [vmem:[%s243 + $0x50] sm:$0xff]
        %v297 = vld [vmem:[%s243 + $0x58] sm:$0xff]
        %v298 = vld [vmem:[%s243 + $0x60] sm:$0xff]
        %v299 = vld [vmem:[%s243 + $0x68] sm:$0xff]
        %v300 = vld [vmem:[%s243 + $0x70] sm:$0xff]
        %v301 = vld [vmem:[%s243 + $0x78] sm:$0xff]
        %v302 = vld [vmem:[#allocation5] sm:$0xff]
        %v303 = vld [vmem:[#allocation5 + $0x8] sm:$0xff]
        %v304 = vld [vmem:[#allocation5 + $0x10] sm:$0xff]
        %v305 = vld [vmem:[#allocation5 + $0x18] sm:$0xff]
        %v306 = vld [vmem:[#allocation5 + $0x20] sm:$0xff]
        %v307 = vld [vmem:[#allocation5 + $0x28] sm:$0xff]
        %v308 = vld [vmem:[#allocation5 + $0x30] sm:$0xff]
        %v309 = vld [vmem:[#allocation5 + $0x38] sm:$0xff]
        %v310 = vld [vmem:[#allocation5 + $0x40] sm:$0xff]
        %v311 = vld [vmem:[#allocation5 + $0x48] sm:$0xff]
        %v312 = vld [vmem:[#allocation5 + $0x50] sm:$0xff]
        %v313 = vld [vmem:[#allocation5 + $0x58] sm:$0xff]
        %v314 = vld [vmem:[#allocation5 + $0x60] sm:$0xff]
        %v315 = vld [vmem:[#allocation5 + $0x68] sm:$0xff]
        %v316 = vld [vmem:[#allocation5 + $0x70] sm:$0xff]
        %v317 = vld [vmem:[#allocation5 + $0x78] sm:$0xff]
        %318 = vmatprep.subr.mxu0 0.0
        %319 = vmatpush1.msra.mxu0 %v302
        %320 = vmatprep.subr.mxu0 0.0
        %321 = vmatpush1.msra.mxu0 %v303
        %322 = vmatprep.subr.mxu0 0.0
        %323 = vmatpush1.msra.mxu0 %v304
        %324 = vmatprep.subr.mxu0 0.0
        %325 = vmatpush1.msra.mxu0 %v305
        %326 = vmatprep.subr.mxu0 0.0
        %327 = vmatpush1.msra.mxu0 %v306
        %328 = vmatprep.subr.mxu0 0.0
        %329 = vmatpush1.msra.mxu0 %v307
        %330 = vmatprep.subr.mxu0 0.0
        %331 = vmatpush1.msra.mxu0 %v308
        %332 = vmatprep.subr.mxu0 0.0
        %333 = vmatpush1.msra.mxu0 %v309
        %334 = vmatprep.subr.mxu0 0.0
        %335 = vmatpush1.msra.mxu0 %v310
        %336 = vmatprep.subr.mxu0 0.0
        %337 = vmatpush1.msra.mxu0 %v311
        %338 = vmatprep.subr.mxu0 0.0
        %339 = vmatpush1.msra.mxu0 %v312
        %340 = vmatprep.subr.mxu0 0.0
        %341 = vmatpush1.msra.mxu0 %v313
        %342 = vmatprep.subr.mxu0 0.0
        %343 = vmatpush1.msra.mxu0 %v314
        %344 = vmatprep.subr.mxu0 0.0
        %345 = vmatpush1.msra.mxu0 %v315
        %346 = vmatprep.subr.mxu0 0.0
        %347 = vmatpush1.msra.mxu0 %v316
        %348 = vmatprep.subr.mxu0 0.0
        %349 = vmatpush1.msra.mxu0 %v317
        %350 = vmatprep.subr.mxu0 0.0
        %351 = vmatpush1.msra.mxu0 0.0
        %352 = vmatprep.subr.mxu0 0.0
        %353 = vmatpush1.msra.mxu0 0.0
        %354 = vmatprep.subr.mxu0 0.0
        %355 = vmatpush1.msra.mxu0 0.0
        %356 = vmatprep.subr.mxu0 0.0
        %357 = vmatpush1.msra.mxu0 0.0
        %358 = vmatprep.subr.mxu0 0.0
        %359 = vmatpush1.msra.mxu0 0.0
        %360 = vmatprep.subr.mxu0 0.0
        %361 = vmatpush1.msra.mxu0 0.0
        %362 = vmatprep.subr.mxu0 0.0
        %363 = vmatpush1.msra.mxu0 0.0
        %364 = vmatprep.subr.mxu0 0.0
        %365 = vmatpush1.msra.mxu0 0.0
        %366 = vmatprep.subr.mxu0 0.0
        %367 = vmatpush1.msra.mxu0 0.0
        %368 = vmatprep.subr.mxu0 0.0
        %369 = vmatpush1.msra.mxu0 0.0
        %370 = vmatprep.subr.mxu0 0.0
        %371 = vmatpush1.msra.mxu0 0.0
        %372 = vmatprep.subr.mxu0 0.0
        %373 = vmatpush1.msra.mxu0 0.0
        %374 = vmatprep.subr.mxu0 0.0
        %375 = vmatpush1.msra.mxu0 0.0
        %376 = vmatprep.subr.mxu0 0.0
        %377 = vmatpush1.msra.mxu0 0.0
        %378 = vmatprep.subr.mxu0 0.0
        %379 = vmatpush1.msra.mxu0 0.0
        %380 = vmatprep.subr.mxu0 0.0
        %381 = vmatpush1.msra.mxu0 0.0
        %382 = vmatprep.mubr.f32.mxu0 0.0
        %383 = vmatmul.mubr.f32.gmra.mrb[0].mxu0 %v286
        %v384 = vpop.f32.mrb[0].mxu0
        %v385 = vadd.f32 0.0, %v384
        %v386 = vpop.f32.mrb[0].mxu0
        %387 = vmatprep.mubr.f32.mxu0 0.0
        %388 = vmatmul.mubr.f32.gmra.mrb[0].mxu0 %v287
        %v389 = vpop.f32.mrb[0].mxu0
        %v390 = vadd.f32 0.0, %v389
        %v391 = vpop.f32.mrb[0].mxu0
        %392 = vmatprep.mubr.f32.mxu0 0.0
        %393 = vmatmul.mubr.f32.gmra.mrb[0].mxu0 %v288
        %v394 = vpop.f32.mrb[0].mxu0
        %v395 = vadd.f32 0.0, %v394
        %v396 = vpop.f32.mrb[0].mxu0
        %397 = vmatprep.mubr.f32.mxu0 0.0
        %398 = vmatmul.mubr.f32.gmra.mrb[0].mxu0 %v289
        %v399 = vpop.f32.mrb[0].mxu0
        %v400 = vadd.f32 0.0, %v399
        %v401 = vpop.f32.mrb[0].mxu0
        %402 = vmatprep.mubr.f32.mxu0 0.0
        %403 = vmatmul.mubr.f32.gmra.mrb[0].mxu0 %v290
        %v404 = vpop.f32.mrb[0].mxu0
        %v405 = vadd.f32 0.0, %v404
        %v406 = vpop.f32.mrb[0].mxu0
        %407 = vmatprep.mubr.f32.mxu0 0.0
        %408 = vmatmul.mubr.f32.gmra.mrb[0].mxu0 %v291
        %v409 = vpop.f32.mrb[0].mxu0
        %v410 = vadd.f32 0.0, %v409
        %v411 = vpop.f32.mrb[0].mxu0
        %412 = vmatprep.mubr.f32.mxu0 0.0
        %413 = vmatmul.mubr.f32.gmra.mrb[0].mxu0 %v292
        %v414 = vpop.f32.mrb[0].mxu0
        %v415 = vadd.f32 0.0, %v414
        %v416 = vpop.f32.mrb[0].mxu0
        %417 = vmatprep.mubr.f32.mxu0 0.0
        %418 = vmatmul.mubr.f32.gmra.mrb[0].mxu0 %v293
        %v419 = vpop.f32.mrb[0].mxu0
        %v420 = vadd.f32 0.0, %v419
        %v421 = vpop.f32.mrb[0].mxu0
        %422 = vmatprep.mubr.f32.mxu0 0.0
        %423 = vmatmul.mubr.f32.gmra.mrb[0].mxu0 %v294
        %v424 = vpop.f32.mrb[0].mxu0
        %v425 = vadd.f32 0.0, %v424
        %v426 = vpop.f32.mrb[0].mxu0
        %427 = vmatprep.mubr.f32.mxu0 0.0
        %428 = vmatmul.mubr.f32.gmra.mrb[0].mxu0 %v295
        %v429 = vpop.f32.mrb[0].mxu0
        %v430 = vadd.f32 0.0, %v429
        %v431 = vpop.f32.mrb[0].mxu0
        %432 = vmatprep.mubr.f32.mxu0 0.0
        %433 = vmatmul.mubr.f32.gmra.mrb[0].mxu0 %v296
        %v434 = vpop.f32.mrb[0].mxu0
        %v435 = vadd.f32 0.0, %v434
        %v436 = vpop.f32.mrb[0].mxu0
        %437 = vmatprep.mubr.f32.mxu0 0.0
        %438 = vmatmul.mubr.f32.gmra.mrb[0].mxu0 %v297
        %v439 = vpop.f32.mrb[0].mxu0
        %v440 = vadd.f32 0.0, %v439
        %v441 = vpop.f32.mrb[0].mxu0
        %442 = vmatprep.mubr.f32.mxu0 0.0
        %443 = vmatmul.mubr.f32.gmra.mrb[0].mxu0 %v298
        %v444 = vpop.f32.mrb[0].mxu0
        %v445 = vadd.f32 0.0, %v444
        %v446 = vpop.f32.mrb[0].mxu0
        %447 = vmatprep.mubr.f32.mxu0 0.0
        %448 = vmatmul.mubr.f32.gmra.mrb[0].mxu0 %v299
        %v449 = vpop.f32.mrb[0].mxu0
        %v450 = vadd.f32 0.0, %v449
        %v451 = vpop.f32.mrb[0].mxu0
        %452 = vmatprep.mubr.f32.mxu0 0.0
        %453 = vmatmul.mubr.f32.gmra.mrb[0].mxu0 %v300
        %v454 = vpop.f32.mrb[0].mxu0
        %v455 = vadd.f32 0.0, %v454
        %v456 = vpop.f32.mrb[0].mxu0
        %457 = vmatprep.mubr.f32.mxu0 0.0
        %458 = vmatmul.mubr.f32.gmra.mrb[0].mxu0 %v301
        %v459 = vpop.f32.mrb[0].mxu0
        %v460 = vadd.f32 0.0, %v459
        %v461 = vpop.f32.mrb[0].mxu0
        %462 = vdwg.mxu0
        %v463 = vpack.c.bf16 %v390, %v385
        %v464 = vpack.c.bf16 %v400, %v395
        %v465 = vpack.c.bf16 %v410, %v405
        %v466 = vpack.c.bf16 %v420, %v415
        %v467 = vpack.c.bf16 %v430, %v425
        %v468 = vpack.c.bf16 %v440, %v435
        %v469 = vpack.c.bf16 %v450, %v445
        %v470 = vpack.c.bf16 %v460, %v455
        %v479 = vunpack.c.l.b16 %v463
        %v480 = vunpack.c.h.b16 %v463
        %v481 = vunpack.c.l.b16 %v464
        %v482 = vunpack.c.h.b16 %v464
        %v483 = vunpack.c.l.b16 %v465
        %v484 = vunpack.c.h.b16 %v465
        %v485 = vunpack.c.l.b16 %v466
        %v486 = vunpack.c.h.b16 %v466
        %v487 = vunpack.c.l.b16 %v467
        %v488 = vunpack.c.h.b16 %v467
        %v489 = vunpack.c.l.b16 %v468
        %v490 = vunpack.c.h.b16 %v468
        %v491 = vunpack.c.l.b16 %v469
        %v492 = vunpack.c.h.b16 %v469
        %v493 = vunpack.c.l.b16 %v470
        %v494 = vunpack.c.h.b16 %v470
        %v495 = vpack.c.b16 %v479, %v479
        %v496 = vpack.c.b16 %v480, %v480
        %v497 = vpack.c.b16 %v481, %v481
        %v498 = vpack.c.b16 %v482, %v482
        %v499 = vpack.c.b16 %v483, %v483
        %v500 = vpack.c.b16 %v484, %v484
        %v501 = vpack.c.b16 %v485, %v485
        %v502 = vpack.c.b16 %v486, %v486
        %v503 = vpack.c.b16 %v487, %v487
        %v504 = vpack.c.b16 %v488, %v488
        %v505 = vpack.c.b16 %v489, %v489
        %v506 = vpack.c.b16 %v490, %v490
        %v507 = vpack.c.b16 %v491, %v491
        %v508 = vpack.c.b16 %v492, %v492
        %v509 = vpack.c.b16 %v493, %v493
        %v510 = vpack.c.b16 %v494, %v494
        %527 = vst [vmem:[%s275] sm:$0xf] %v495
        %528 = vst [vmem:[%s275 + $0x4] sm:$0xf] %v496
        %529 = vst [vmem:[%s275 + $0x8] sm:$0xf] %v497
        %530 = vst [vmem:[%s275 + $0xc] sm:$0xf] %v498
        %531 = vst [vmem:[%s275 + $0x10] sm:$0xf] %v499
        %532 = vst [vmem:[%s275 + $0x14] sm:$0xf] %v500
        %533 = vst [vmem:[%s275 + $0x18] sm:$0xf] %v501
        %534 = vst [vmem:[%s275 + $0x1c] sm:$0xf] %v502
        %535 = vst [vmem:[%s275 + $0x20] sm:$0xf] %v503
        %536 = vst [vmem:[%s275 + $0x24] sm:$0xf] %v504
        %537 = vst [vmem:[%s275 + $0x28] sm:$0xf] %v505
        %538 = vst [vmem:[%s275 + $0x2c] sm:$0xf] %v506
        %539 = vst [vmem:[%s275 + $0x30] sm:$0xf] %v507
        %540 = vst [vmem:[%s275 + $0x34] sm:$0xf] %v508
        %541 = vst [vmem:[%s275 + $0x38] sm:$0xf] %v509
        %542 = vst [vmem:[%s275 + $0x3c] sm:$0xf] %v510
        %v543 = vld [vmem:[#allocation7] sm:$0xff]
        %v544 = vld [vmem:[#allocation7 + $0x8] sm:$0xff]
        %v545 = vld [vmem:[#allocation7 + $0x10] sm:$0xff]
        %v546 = vld [vmem:[#allocation7 + $0x18] sm:$0xff]
        %v547 = vld [vmem:[#allocation7 + $0x20] sm:$0xff]
        %v548 = vld [vmem:[#allocation7 + $0x28] sm:$0xff]
        %v549 = vld [vmem:[#allocation7 + $0x30] sm:$0xff]
        %v550 = vld [vmem:[#allocation7 + $0x38] sm:$0xff]
        %v551 = vld [vmem:[#allocation7 + $0x40] sm:$0xff]
        %v552 = vld [vmem:[#allocation7 + $0x48] sm:$0xff]
        %v553 = vld [vmem:[#allocation7 + $0x50] sm:$0xff]
        %v554 = vld [vmem:[#allocation7 + $0x58] sm:$0xff]
        %v555 = vld [vmem:[#allocation7 + $0x60] sm:$0xff]
        %v556 = vld [vmem:[#allocation7 + $0x68] sm:$0xff]
        %v557 = vld [vmem:[#allocation7 + $0x70] sm:$0xff]
        %v558 = vld [vmem:[#allocation7 + $0x78] sm:$0xff]
        %v559 = vld [vmem:[%s3] sm:$0x1]
        %v561 = vlaneseq
        %v562 = vshrl.u32 %v561, 7
        %v563 = vsub.s32 0, %v562
        %v564 = vrot.slane %v559, %v563
        %566 = vmatprep.subr.mxu0 0.0
        %567 = vmatpush1.msra.mxu0 %v543
        %568 = vmatprep.subr.mxu0 0.0
        %569 = vmatpush1.msra.mxu0 %v544
        %570 = vmatprep.subr.mxu0 0.0
        %571 = vmatpush1.msra.mxu0 %v545
        %572 = vmatprep.subr.mxu0 0.0
        %573 = vmatpush1.msra.mxu0 %v546
        %574 = vmatprep.subr.mxu0 0.0
        %575 = vmatpush1.msra.mxu0 %v547
        %576 = vmatprep.subr.mxu0 0.0
        %577 = vmatpush1.msra.mxu0 %v548
        %578 = vmatprep.subr.mxu0 0.0
        %579 = vmatpush1.msra.mxu0 %v549
        %580 = vmatprep.subr.mxu0 0.0
        %581 = vmatpush1.msra.mxu0 %v550
        %582 = vmatprep.subr.mxu0 0.0
        %583 = vmatpush1.msra.mxu0 %v551
        %584 = vmatprep.subr.mxu0 0.0
        %585 = vmatpush1.msra.mxu0 %v552
        %586 = vmatprep.subr.mxu0 0.0
        %587 = vmatpush1.msra.mxu0 %v553
        %588 = vmatprep.subr.mxu0 0.0
        %589 = vmatpush1.msra.mxu0 %v554
        %590 = vmatprep.subr.mxu0 0.0
        %591 = vmatpush1.msra.mxu0 %v555
        %592 = vmatprep.subr.mxu0 0.0
        %593 = vmatpush1.msra.mxu0 %v556
        %594 = vmatprep.subr.mxu0 0.0
        %595 = vmatpush1.msra.mxu0 %v557
        %596 = vmatprep.subr.mxu0 0.0
        %597 = vmatpush1.msra.mxu0 %v558
        %598 = vmatprep.subr.mxu0 0.0
        %599 = vmatpush1.msra.mxu0 0.0
        %600 = vmatprep.subr.mxu0 0.0
        %601 = vmatpush1.msra.mxu0 0.0
        %602 = vmatprep.subr.mxu0 0.0
        %603 = vmatpush1.msra.mxu0 0.0
        %604 = vmatprep.subr.mxu0 0.0
        %605 = vmatpush1.msra.mxu0 0.0
        %606 = vmatprep.subr.mxu0 0.0
        %607 = vmatpush1.msra.mxu0 0.0
        %608 = vmatprep.subr.mxu0 0.0
        %609 = vmatpush1.msra.mxu0 0.0
        %610 = vmatprep.subr.mxu0 0.0
        %611 = vmatpush1.msra.mxu0 0.0
        %612 = vmatprep.subr.mxu0 0.0
        %613 = vmatpush1.msra.mxu0 0.0
        %614 = vmatprep.subr.mxu0 0.0
        %615 = vmatpush1.msra.mxu0 0.0
        %616 = vmatprep.subr.mxu0 0.0
        %617 = vmatpush1.msra.mxu0 0.0
        %618 = vmatprep.subr.mxu0 0.0
        %619 = vmatpush1.msra.mxu0 0.0
        %620 = vmatprep.subr.mxu0 0.0
        %621 = vmatpush1.msra.mxu0 0.0
        %622 = vmatprep.subr.mxu0 0.0
        %623 = vmatpush1.msra.mxu0 0.0
        %624 = vmatprep.subr.mxu0 0.0
        %625 = vmatpush1.msra.mxu0 0.0
        %626 = vmatprep.subr.mxu0 0.0
        %627 = vmatpush1.msra.mxu0 0.0
        %628 = vmatprep.subr.mxu0 0.0
        %629 = vmatpush1.msra.mxu0 0.0
        %630 = vmatprep.mubr.f32.mxu0 0.0
        %631 = vmatmul.mubr.f32.gmra.mrb[0].mxu0 %v286
        %v632 = vpop.f32.mrb[0].mxu0
        %v633 = vadd.f32 %v564, %v632
        %v634 = vpop.f32.mrb[0].mxu0
        %635 = vmatprep.mubr.f32.mxu0 0.0
        %636 = vmatmul.mubr.f32.gmra.mrb[0].mxu0 %v287
        %v637 = vpop.f32.mrb[0].mxu0
        %v638 = vadd.f32 %v564, %v637
        %v639 = vpop.f32.mrb[0].mxu0
        %640 = vmatprep.mubr.f32.mxu0 0.0
        %641 = vmatmul.mubr.f32.gmra.mrb[0].mxu0 %v288
        %v642 = vpop.f32.mrb[0].mxu0
        %v643 = vadd.f32 %v564, %v642
        %v644 = vpop.f32.mrb[0].mxu0
        %645 = vmatprep.mubr.f32.mxu0 0.0
        %646 = vmatmul.mubr.f32.gmra.mrb[0].mxu0 %v289
        %v647 = vpop.f32.mrb[0].mxu0
        %v648 = vadd.f32 %v564, %v647
        %v649 = vpop.f32.mrb[0].mxu0
        %650 = vmatprep.mubr.f32.mxu0 0.0
        %651 = vmatmul.mubr.f32.gmra.mrb[0].mxu0 %v290
        %v652 = vpop.f32.mrb[0].mxu0
        %v653 = vadd.f32 %v564, %v652
        %v654 = vpop.f32.mrb[0].mxu0
        %655 = vmatprep.mubr.f32.mxu0 0.0
        %656 = vmatmul.mubr.f32.gmra.mrb[0].mxu0 %v291
        %v657 = vpop.f32.mrb[0].mxu0
        %v658 = vadd.f32 %v564, %v657
        %v659 = vpop.f32.mrb[0].mxu0
        %660 = vmatprep.mubr.f32.mxu0 0.0
        %661 = vmatmul.mubr.f32.gmra.mrb[0].mxu0 %v292
        %v662 = vpop.f32.mrb[0].mxu0
        %v663 = vadd.f32 %v564, %v662
        %v664 = vpop.f32.mrb[0].mxu0
        %665 = vmatprep.mubr.f32.mxu0 0.0
        %666 = vmatmul.mubr.f32.gmra.mrb[0].mxu0 %v293
        %v667 = vpop.f32.mrb[0].mxu0
        %v668 = vadd.f32 %v564, %v667
        %v669 = vpop.f32.mrb[0].mxu0
        %670 = vmatprep.mubr.f32.mxu0 0.0
        %671 = vmatmul.mubr.f32.gmra.mrb[0].mxu0 %v294
        %v672 = vpop.f32.mrb[0].mxu0
        %v673 = vadd.f32 %v564, %v672
        %v674 = vpop.f32.mrb[0].mxu0
        %675 = vmatprep.mubr.f32.mxu0 0.0
        %676 = vmatmul.mubr.f32.gmra.mrb[0].mxu0 %v295
        %v677 = vpop.f32.mrb[0].mxu0
        %v678 = vadd.f32 %v564, %v677
        %v679 = vpop.f32.mrb[0].mxu0
        %680 = vmatprep.mubr.f32.mxu0 0.0
        %681 = vmatmul.mubr.f32.gmra.mrb[0].mxu0 %v296
        %v682 = vpop.f32.mrb[0].mxu0
        %v683 = vadd.f32 %v564, %v682
        %v684 = vpop.f32.mrb[0].mxu0
        %685 = vmatprep.mubr.f32.mxu0 0.0
        %686 = vmatmul.mubr.f32.gmra.mrb[0].mxu0 %v297
        %v687 = vpop.f32.mrb[0].mxu0
        %v688 = vadd.f32 %v564, %v687
        %v689 = vpop.f32.mrb[0].mxu0
        %690 = vmatprep.mubr.f32.mxu0 0.0
        %691 = vmatmul.mubr.f32.gmra.mrb[0].mxu0 %v298
        %v692 = vpop.f32.mrb[0].mxu0
        %v693 = vadd.f32 %v564, %v692
        %v694 = vpop.f32.mrb[0].mxu0
        %695 = vmatprep.mubr.f32.mxu0 0.0
        %696 = vmatmul.mubr.f32.gmra.mrb[0].mxu0 %v299
        %v697 = vpop.f32.mrb[0].mxu0
        %v698 = vadd.f32 %v564, %v697
        %v699 = vpop.f32.mrb[0].mxu0
        %700 = vmatprep.mubr.f32.mxu0 0.0
        %701 = vmatmul.mubr.f32.gmra.mrb[0].mxu0 %v300
        %v702 = vpop.f32.mrb[0].mxu0
        %v703 = vadd.f32 %v564, %v702
        %v704 = vpop.f32.mrb[0].mxu0
        %705 = vmatprep.mubr.f32.mxu0 0.0
        %706 = vmatmul.mubr.f32.gmra.mrb[0].mxu0 %v301
        %v707 = vpop.f32.mrb[0].mxu0
        %v708 = vadd.f32 %v564, %v707
        %v709 = vpop.f32.mrb[0].mxu0
        %710 = vdwg.mxu0
        %711 = vst [vmem:[%s282] sm:$0xff] %v633
        %712 = vst [vmem:[%s282 + $0x8] sm:$0xff] %v638
        %713 = vst [vmem:[%s282 + $0x10] sm:$0xff] %v643
        %714 = vst [vmem:[%s282 + $0x18] sm:$0xff] %v648
        %715 = vst [vmem:[%s282 + $0x20] sm:$0xff] %v653
        %716 = vst [vmem:[%s282 + $0x28] sm:$0xff] %v658
        %717 = vst [vmem:[%s282 + $0x30] sm:$0xff] %v663
        %718 = vst [vmem:[%s282 + $0x38] sm:$0xff] %v668
        %719 = vst [vmem:[%s282 + $0x40] sm:$0xff] %v673
        %720 = vst [vmem:[%s282 + $0x48] sm:$0xff] %v678
        %721 = vst [vmem:[%s282 + $0x50] sm:$0xff] %v683
        %722 = vst [vmem:[%s282 + $0x58] sm:$0xff] %v688
        %723 = vst [vmem:[%s282 + $0x60] sm:$0xff] %v693
        %724 = vst [vmem:[%s282 + $0x68] sm:$0xff] %v698
        %725 = vst [vmem:[%s282 + $0x70] sm:$0xff] %v703
        %726 = vst [vmem:[%s282 + $0x78] sm:$0xff] %v708
        %s727 = sand.u32 %s124, 1
        %s728 = scalar_lea.sflag [#allocation4], %s727
        %s729 = sand.u32 %s124, 1
        %s730 = smul.addr %s729, 64
        %s731 = scalar_lea.vmem [#allocation8], %s730
        %s732 = sand.u32 %s150, 1
        %s733 = scalar_lea.sflag [#allocation10], %s732
        %s734 = sand.u32 %s150, 1
        %s735 = smul.addr %s734, 128
        %s736 = scalar_lea.vmem [#allocation9], %s735
        // Predicated region
        $region49: #{tpu_custom_call.1} parent=35 // pred_check
          %p737 = pneg %p134
        $region50: #{tpu_custom_call.1} parent=35 // pred_check_branch
          %739 = sbr.rel (%p737) target = $region52
        $region51: #{tpu_custom_call.1} parent=35 // pred_region
          %s740 = smul.u32 16, %s27
          %s742 = ssub.s32 1024, 1024
          %743 = vsyncadd %s728, %s742
          %s744 = smul.addr %s740, 64
          %s745 = scalar_lea.hbm %s4, %s744
          %s746 = sshll.u32 %s731, 4
          %s747 = int_to_ptr.vmem [resolvable:$true] %s746
          %752 = dma.vmem_to_hbm [thread:$0]  %s747, 1024, %s745, %s728, 64, 64, 4
        $region52: #{tpu_custom_call.1} parent=35 // pred_fallthru
          _
        // Predicated region
        $region53: #{tpu_custom_call.1} parent=35 // pred_check
          %p753 = pneg %p160
        $region54: #{tpu_custom_call.1} parent=35 // pred_check_branch
          %755 = sbr.rel (%p753) target = $region56
        $region55: #{tpu_custom_call.1} parent=35 // pred_region
          %s756 = smul.u32 16, %s27
          %s758 = ssub.s32 2048, 2048
          %759 = vsyncadd %s733, %s758
          %s760 = smul.addr %s756, 128
          %s761 = scalar_lea.hbm %s5, %s760
          %s762 = sshll.u32 %s736, 4
          %s763 = int_to_ptr.vmem [resolvable:$true] %s762
          %768 = dma.vmem_to_hbm [thread:$0]  %s763, 2048, %s761, %s733, 128, 128, 8
        $region56: #{tpu_custom_call.1} parent=35 // pred_fallthru
          _
      $region36: #{tpu_custom_call.1} parent=5 // pred_fallthru
        _
      %p769 = scmp.le.s32.totalorder 2, %s22
      // Predicated region
      $region57: #{tpu_custom_call.1} parent=5 // pred_check
        %p770 = pneg %p769
      $region58: #{tpu_custom_call.1} parent=5 // pred_check_branch
        %772 = sbr.rel (%p770) target = $region60
      $region59: #{tpu_custom_call.1} parent=5 // pred_region
        %s773 = ssub.s32 %s22, 2
        // Predicated region
        $region61: #{tpu_custom_call.1} parent=59 // pred_check
          %p774 = pneg %p140
        $region62: #{tpu_custom_call.1} parent=59 // pred_check_branch
          %776 = sbr.rel (%p774) target = $region64
        $region63: #{tpu_custom_call.1} parent=59 // pred_region
          %s777 = sand.u32 %s125, 1
          %s778 = scalar_lea.sflag [#allocation4], %s777
          %s779 = sand.u32 %s125, 1
          %s780 = smul.addr %s779, 64
          %s781 = scalar_lea.vmem [#allocation8], %s780
          %782 = dma.done %s778, 1024
        $region64: #{tpu_custom_call.1} parent=59 // pred_fallthru
          _
        // Predicated region
        $region65: #{tpu_custom_call.1} parent=59 // pred_check
          %p783 = pneg %p166
        $region66: #{tpu_custom_call.1} parent=59 // pred_check_branch
          %785 = sbr.rel (%p783) target = $region68
        $region67: #{tpu_custom_call.1} parent=59 // pred_region
          %s786 = sand.u32 %s151, 1
          %s787 = scalar_lea.sflag [#allocation10], %s786
          %s788 = sand.u32 %s151, 1
          %s789 = smul.addr %s788, 128
          %s790 = scalar_lea.vmem [#allocation9], %s789
          %791 = dma.done %s787, 2048
        $region68: #{tpu_custom_call.1} parent=59 // pred_fallthru
          _
      $region60: #{tpu_custom_call.1} parent=5 // pred_fallthru
        _
    $region6: #{tpu_custom_call.1} parent=1 // loop_footer
      %s26 = sadd.s32 1, %s22
    $region7: #{tpu_custom_call.1} parent=1 // loop_footer_branch
      %21 = sbr.rel target = $region3
    $region8: #{tpu_custom_call.1} parent=1 // loop_exit
      _
    %792 = vsyncpa [#allocation3], 1
    %s793 = scalar_lea.sflag [#allocation3], 1
    %794 = vsyncpa %s793, 1
    %795 = vsyncpa [#allocation6], 1
    %796 = vsyncpa [#allocation4], 1
    %s797 = scalar_lea.sflag [#allocation4], 1
    %798 = vsyncpa %s797, 1
    %799 = vsyncpa [#allocation10], 1
    %s800 = scalar_lea.sflag [#allocation10], 1
    %801 = vsyncpa %s800, 1

</llo_original>
